<compile_context>
chip_gen: v5e
topology: v5e:2x2
jax: 0.10.0
libtpu: 0.0.40
codegen_flags: <defaults>
</compile_context>

<pallas_src>
import functools

import jax
import jax.numpy as jnp
from jax.experimental import pallas as pl
from jax.experimental.pallas import tpu as pltpu


def _round_up(x, m):
    return ((x + m - 1) // m) * m


def _cell_kernel(h_t_ref, h_hat_ref, x_ref,
                 wbig_ref, bbig_ref,
                 wh_ref, wx_ref, bhx_ref,
                 out_ref, *, activate):
    H = out_ref.shape[1]

    # One wide matmul produces all three h_hat-driven terms: [d_z_h | d_z_x | b_z_b]
    d_all = jnp.dot(h_hat_ref[...], wbig_ref[...],
                    preferred_element_type=jnp.float32) + bbig_ref[...]
    d_z_h = d_all[:, :H]
    d_z_x = d_all[:, H:2 * H]
    b_z_b = d_all[:, 2 * H:]

    wh_h = jnp.dot(h_t_ref[...], wh_ref[...],
                   preferred_element_type=jnp.float32) + bhx_ref[:, :H]
    wx_x = jnp.dot(x_ref[...], wx_ref[...],
                   preferred_element_type=jnp.float32) + bhx_ref[:, H:]

    h_new = d_z_h * wh_h + d_z_x * wx_x + b_z_b
    # Dropout(p=0.1): eval-mode identity.
    if activate == "relu":
        y = jnp.maximum(h_new, 0.0)
    elif activate == "sigmoid":
        y = jax.nn.sigmoid(h_new)
    else:  # "tanh"
        y = jnp.tanh(h_new)
    out_ref[...] = y.astype(out_ref.dtype)


def inference_net_rnn_cell(h_t, h_t_hat, inf_inputs, params,
                           activate="tanh", compute_dtype=jnp.bfloat16):
    """params: dict of pre-transposed weights (in, out) and biases (1, out)."""
    B, hidden_dim = h_t.shape
    hidden_hat_dim = h_t_hat.shape[1]
    input_dim = inf_inputs.shape[1]

    # ---- fuse the low-rank two-stage path once, in f32 ----
    W_eff_h = params["w_hh_w"] @ params["W_hz_w"]               # (HH, H)
    b_eff_h = params["w_hh_b"] @ params["W_hz_w"]               # (1, H)
    W_eff_x = params["w_hx_w"] @ params["W_xz_w"]
    b_eff_x = params["w_hx_b"] @ params["W_xz_w"]
    W_eff_b = params["w_hb_w"] @ params["b_w"]
    b_eff_b = params["w_hb_b"] @ params["b_w"] + params["b_b"]

    # ---- pad to lane/sublane-dense shapes ----
    Bp = _round_up(B, 8)
    Hp = _round_up(hidden_dim, 128)
    HHp = _round_up(hidden_hat_dim, 128)
    Ip = _round_up(input_dim, 128)

    def pad2(a, rows, cols):
        return jnp.pad(a, ((0, rows - a.shape[0]), (0, cols - a.shape[1])))

    h_t_p = pad2(h_t, Bp, Hp).astype(compute_dtype)
    h_hat_p = pad2(h_t_hat, Bp, HHp).astype(compute_dtype)
    x_p = pad2(inf_inputs, Bp, Ip).astype(compute_dtype)

    W_big = jnp.concatenate(
        [pad2(W_eff_h, HHp, Hp), pad2(W_eff_x, HHp, Hp), pad2(W_eff_b, HHp, Hp)],
        axis=1).astype(compute_dtype)                           # (HHp, 3*Hp)
    b_big = jnp.concatenate(
        [pad2(b_eff_h, 1, Hp), pad2(b_eff_x, 1, Hp), pad2(b_eff_b, 1, Hp)],
        axis=1).astype(jnp.float32)                             # (1, 3*Hp)

    Wh_p = pad2(params["Wh_w"], Hp, Hp).astype(compute_dtype)   # (Hp, Hp)
    Wx_p = pad2(params["Wx_w"], Ip, Hp).astype(compute_dtype)   # (Ip, Hp)
    b_hx = jnp.concatenate(
        [pad2(params["Wh_b"], 1, Hp), pad2(params["Wx_b"], 1, Hp)],
        axis=1).astype(jnp.float32)                             # (1, 2*Hp)

    vmem = pl.BlockSpec(memory_space=pltpu.MemorySpace.VMEM)
    out_p = pl.pallas_call(
        functools.partial(_cell_kernel, activate=activate),
        out_shape=jax.ShapeDtypeStruct((Bp, Hp), jnp.float32),
        in_specs=[vmem] * 8,
        out_specs=vmem,
    )(h_t_p, h_hat_p, x_p, W_big, b_big, Wh_p, Wx_p, b_hx)

    return out_p[:B, :hidden_dim]


def init_params(key, z_dim, input_dim, hidden_hat_dim, hidden_dim):
    """Deterministic synthetic parameters, pre-transposed to (in, out)."""
    keys = jax.random.split(key, 16)
    k = iter(keys)

    def w(kk, fan_in, fan_out):
        return jax.random.normal(kk, (fan_in, fan_out), jnp.float32) * 0.1

    def bvec(kk, fan_out):
        return jax.random.normal(kk, (1, fan_out), jnp.float32) * 0.1

    return {
        "w_hh_w": w(next(k), hidden_hat_dim, z_dim), "w_hh_b": bvec(next(k), z_dim),
        "w_hx_w": w(next(k), hidden_hat_dim, z_dim), "w_hx_b": bvec(next(k), z_dim),
        "w_hb_w": w(next(k), hidden_hat_dim, z_dim), "w_hb_b": bvec(next(k), z_dim),
        "W_hz_w": w(next(k), z_dim, hidden_dim),
        "W_xz_w": w(next(k), z_dim, hidden_dim),
        "b_w":    w(next(k), z_dim, hidden_dim), "b_b": bvec(next(k), hidden_dim),
        "Wh_w":   w(next(k), hidden_dim, hidden_dim), "Wh_b": bvec(next(k), hidden_dim),
        "Wx_w":   w(next(k), input_dim, hidden_dim), "Wx_b": bvec(next(k), hidden_dim),
    }


def reference_forward(h_t, h_t_hat, x, p):
    """Pure-JAX f32 reference with the original (un-fused) two-stage structure."""
    z_h = h_t_hat @ p["w_hh_w"] + p["w_hh_b"]
    z_x = h_t_hat @ p["w_hx_w"] + p["w_hx_b"]
    z_b = h_t_hat @ p["w_hb_w"] + p["w_hb_b"]
    d_z_h = z_h @ p["W_hz_w"]
    d_z_x = z_x @ p["W_xz_w"]
    b_z_b = z_b @ p["b_w"] + p["b_b"]
    h_new = (d_z_h * (h_t @ p["Wh_w"] + p["Wh_b"])
             + d_z_x * (x @ p["Wx_w"] + p["Wx_b"])
             + b_z_b)
    return jnp.tanh(h_new)


if __name__ == "__main__":
    # Small, forward-consistent shapes (padded internally to (8, 128) tiles).
    B = 4
    z_dim = 8
    input_dim = 16
    hidden_hat_dim = 32
    hidden_dim = 32

    key = jax.random.PRNGKey(0)
    k_params, k_h, k_hh, k_x = jax.random.split(key, 4)

    params = init_params(k_params, z_dim, input_dim, hidden_hat_dim, hidden_dim)
    h_t = jax.random.normal(k_h, (B, hidden_dim), jnp.float32)
    h_t_hat = jax.random.normal(k_hh, (B, hidden_hat_dim), jnp.float32)
    inf_inputs = jax.random.normal(k_x, (B, input_dim), jnp.float32)

    cell = jax.jit(functools.partial(inference_net_rnn_cell, activate="tanh"))
    out = cell(h_t, h_t_hat, inf_inputs, params)
    out = jax.block_until_ready(out)

    ref = reference_forward(h_t, h_t_hat, inf_inputs, params)
    assert out.shape == (B, hidden_dim)
    # bf16 MXU operands with f32 accumulation vs. pure-f32 reference -> loosened tolerance.
    assert jnp.allclose(out, ref, atol=3e-2, rtol=3e-2), "mismatch vs pure-JAX reference"

    print("KERNEL_OK")
</pallas_src>

<mosaic_0001>
module attributes {stable_mosaic.version = 11 : i64} {
  func.func @_cell_kernel(%arg0: memref<8x128xbf16, #tpu.memory_space<vmem>>, %arg1: memref<8x128xbf16, #tpu.memory_space<vmem>>, %arg2: memref<8x128xbf16, #tpu.memory_space<vmem>>, %arg3: memref<128x384xbf16, #tpu.memory_space<vmem>>, %arg4: memref<1x384xf32, #tpu.memory_space<vmem>>, %arg5: memref<128x128xbf16, #tpu.memory_space<vmem>>, %arg6: memref<128x128xbf16, #tpu.memory_space<vmem>>, %arg7: memref<1x256xf32, #tpu.memory_space<vmem>>, %arg8: memref<8x128xf32, #tpu.memory_space<vmem>>) attributes {dimension_semantics = [], scalar_prefetch = 0 : i64, scratch_operands = 0 : i64, tpu.core_type = #tpu.core_type<tc>} {
    %c0 = arith.constant 0 : index
    %c0_0 = arith.constant 0 : index
    %0 = vector.load %arg1[%c0, %c0_0] : memref<8x128xbf16, #tpu.memory_space<vmem>>, vector<8x128xbf16>
    %c0_1 = arith.constant 0 : index
    %c0_2 = arith.constant 0 : index
    %1 = vector.load %arg3[%c0_1, %c0_2] : memref<128x384xbf16, #tpu.memory_space<vmem>>, vector<128x384xbf16>
    %cst = arith.constant dense<0.000000e+00> : vector<8x384xf32>
    %2 = tpu.matmul %0, %1, %cst {dimension_numbers = #tpu.dot_dimension_numbers<[1], [0], [0], [1], [0, 0, 1, 1], [], []>} : vector<8x128xbf16>, vector<128x384xbf16>, vector<8x384xf32> -> vector<8x384xf32>
    %c0_3 = arith.constant 0 : index
    %c0_4 = arith.constant 0 : index
    %3 = vector.load %arg4[%c0_3, %c0_4] : memref<1x384xf32, #tpu.memory_space<vmem>>, vector<1x384xf32>
    %4 = vector.broadcast %3 : vector<1x384xf32> to vector<8x384xf32>
    %5 = arith.addf %2, %4 : vector<8x384xf32>
    %6 = vector.extract_strided_slice %5 {offsets = [0, 0], sizes = [8, 128], strides = [1, 1]} : vector<8x384xf32> to vector<8x128xf32>
    %7 = vector.extract_strided_slice %5 {offsets = [0, 128], sizes = [8, 128], strides = [1, 1]} : vector<8x384xf32> to vector<8x128xf32>
    %8 = vector.extract_strided_slice %5 {offsets = [0, 256], sizes = [8, 128], strides = [1, 1]} : vector<8x384xf32> to vector<8x128xf32>
    %c0_5 = arith.constant 0 : index
    %c0_6 = arith.constant 0 : index
    %9 = vector.load %arg0[%c0_5, %c0_6] : memref<8x128xbf16, #tpu.memory_space<vmem>>, vector<8x128xbf16>
    %c0_7 = arith.constant 0 : index
    %c0_8 = arith.constant 0 : index
    %10 = vector.load %arg5[%c0_7, %c0_8] : memref<128x128xbf16, #tpu.memory_space<vmem>>, vector<128x128xbf16>
    %cst_9 = arith.constant dense<0.000000e+00> : vector<8x128xf32>
    %11 = tpu.matmul %9, %10, %cst_9 {dimension_numbers = #tpu.dot_dimension_numbers<[1], [0], [0], [1], [0, 0, 1, 1], [], []>} : vector<8x128xbf16>, vector<128x128xbf16>, vector<8x128xf32> -> vector<8x128xf32>
    %c0_10 = arith.constant 0 : index
    %c0_11 = arith.constant 0 : index
    %12 = vector.load %arg7[%c0_10, %c0_11] : memref<1x256xf32, #tpu.memory_space<vmem>>, vector<1x128xf32>
    %13 = vector.broadcast %12 : vector<1x128xf32> to vector<8x128xf32>
    %14 = arith.addf %11, %13 : vector<8x128xf32>
    %c0_12 = arith.constant 0 : index
    %c0_13 = arith.constant 0 : index
    %15 = vector.load %arg2[%c0_12, %c0_13] : memref<8x128xbf16, #tpu.memory_space<vmem>>, vector<8x128xbf16>
    %c0_14 = arith.constant 0 : index
    %c0_15 = arith.constant 0 : index
    %16 = vector.load %arg6[%c0_14, %c0_15] : memref<128x128xbf16, #tpu.memory_space<vmem>>, vector<128x128xbf16>
    %cst_16 = arith.constant dense<0.000000e+00> : vector<8x128xf32>
    %17 = tpu.matmul %15, %16, %cst_16 {dimension_numbers = #tpu.dot_dimension_numbers<[1], [0], [0], [1], [0, 0, 1, 1], [], []>} : vector<8x128xbf16>, vector<128x128xbf16>, vector<8x128xf32> -> vector<8x128xf32>
    %c0_17 = arith.constant 0 : index
    %c128 = arith.constant 128 : index
    %18 = vector.load %arg7[%c0_17, %c128] : memref<1x256xf32, #tpu.memory_space<vmem>>, vector<1x128xf32>
    %19 = vector.broadcast %18 : vector<1x128xf32> to vector<8x128xf32>
    %20 = arith.addf %17, %19 : vector<8x128xf32>
    %21 = arith.mulf %6, %14 : vector<8x128xf32>
    %22 = arith.mulf %7, %20 : vector<8x128xf32>
    %23 = arith.addf %21, %22 : vector<8x128xf32>
    %24 = arith.addf %23, %8 : vector<8x128xf32>
    %25 = math.tanh %24 : vector<8x128xf32>
    %c0_18 = arith.constant 0 : index
    %c0_19 = arith.constant 0 : index
    %26 = vector.load %arg8[%c0_18, %c0_19] : memref<8x128xf32, #tpu.memory_space<vmem>>, vector<8x128xf32>
    tpu.vector_store %arg8[%c0_18, %c0_19], %25 {strides = array<i32>} : memref<8x128xf32, #tpu.memory_space<vmem>>, vector<8x128xf32>,
    return
  }
}

</mosaic_0001>

<llo_original>
// kernel: inference_net_rnn_cell.1
$region0: #{inference_net_rnn_cell.1}
  #allocation0 [shape = 'u32[]', space=smem, size = 0x4, offset = 0x4, fixed_abs, tag = 'smem constant byte address 0x4 - core index']
  #allocation1 [shape = 'u32[72,128]{1,0:T(1,128)}', space=vmem, size = 0x9000, scoped, tag = 'internal scratch']
  %s0 = inlined_call_operand.vmem [shape: bf16[8,128], index: 0, kind: input, shape index: {}]
  %s1 = inlined_call_operand.vmem [shape: bf16[8,128], index: 1, kind: input, shape index: {}]
  %s2 = inlined_call_operand.vmem [shape: bf16[8,128], index: 2, kind: input, shape index: {}]
  %s3 = inlined_call_operand.vmem [shape: bf16[128,384], index: 3, kind: input, shape index: {}]
  %s4 = inlined_call_operand.vmem [shape: f32[1,384], index: 4, kind: input, shape index: {}]
  %s5 = inlined_call_operand.vmem [shape: bf16[128,128], index: 5, kind: input, shape index: {}]
  %s6 = inlined_call_operand.vmem [shape: bf16[128,128], index: 6, kind: input, shape index: {}]
  %s7 = inlined_call_operand.vmem [shape: f32[1,256], index: 7, kind: input, shape index: {}]
  %s8 = inlined_call_operand.vmem [shape: f32[8,128], index: 8, kind: output, shape index: {}]
  %s9 = sld [smem:[#allocation0]]
  $region42: #{inference_net_rnn_cell.1} parent=0
    _
  %s11 = ssub.s32 1, %s9
  %s12 = scalar_select 0, %s11, %s9
  // Predicated region
  $region2: #{inference_net_rnn_cell.1} parent=0 // pred_check
    _
  $region3: #{inference_net_rnn_cell.1} parent=0 // pred_check_branch
    %14 = sbr.rel (0) target = $region5
  $region4: #{inference_net_rnn_cell.1} parent=0 // pred_region
    _
  $region5: #{inference_net_rnn_cell.1} parent=0 // pred_fallthru
    _
  // Predicated region
  $region6: #{inference_net_rnn_cell.1} parent=0 // pred_check
    _
  $region7: #{inference_net_rnn_cell.1} parent=0 // pred_check_branch
    %16 = sbr.rel (0) target = $region9
  $region8: #{inference_net_rnn_cell.1} parent=0 // pred_region
    _
  $region9: #{inference_net_rnn_cell.1} parent=0 // pred_fallthru
    _
  // Predicated region
  $region10: #{inference_net_rnn_cell.1} parent=0 // pred_check
    _
  $region11: #{inference_net_rnn_cell.1} parent=0 // pred_check_branch
    %18 = sbr.rel (0) target = $region13
  $region12: #{inference_net_rnn_cell.1} parent=0 // pred_region
    _
  $region13: #{inference_net_rnn_cell.1} parent=0 // pred_fallthru
    _
  // Predicated region
  $region14: #{inference_net_rnn_cell.1} parent=0 // pred_check
    _
  $region15: #{inference_net_rnn_cell.1} parent=0 // pred_check_branch
    %20 = sbr.rel (0) target = $region17
  $region16: #{inference_net_rnn_cell.1} parent=0 // pred_region
    _
  $region17: #{inference_net_rnn_cell.1} parent=0 // pred_fallthru
    _
  // Predicated region
  $region18: #{inference_net_rnn_cell.1} parent=0 // pred_check
    _
  $region19: #{inference_net_rnn_cell.1} parent=0 // pred_check_branch
    %22 = sbr.rel (0) target = $region21
  $region20: #{inference_net_rnn_cell.1} parent=0 // pred_region
    _
  $region21: #{inference_net_rnn_cell.1} parent=0 // pred_fallthru
    _
  // Predicated region
  $region22: #{inference_net_rnn_cell.1} parent=0 // pred_check
    _
  $region23: #{inference_net_rnn_cell.1} parent=0 // pred_check_branch
    %24 = sbr.rel (0) target = $region25
  $region24: #{inference_net_rnn_cell.1} parent=0 // pred_region
    _
  $region25: #{inference_net_rnn_cell.1} parent=0 // pred_fallthru
    _
  // Predicated region
  $region26: #{inference_net_rnn_cell.1} parent=0 // pred_check
    _
  $region27: #{inference_net_rnn_cell.1} parent=0 // pred_check_branch
    %26 = sbr.rel (0) target = $region29
  $region28: #{inference_net_rnn_cell.1} parent=0 // pred_region
    _
  $region29: #{inference_net_rnn_cell.1} parent=0 // pred_fallthru
    _
  // Predicated region
  $region30: #{inference_net_rnn_cell.1} parent=0 // pred_check
    _
  $region31: #{inference_net_rnn_cell.1} parent=0 // pred_check_branch
    %28 = sbr.rel (0) target = $region33
  $region32: #{inference_net_rnn_cell.1} parent=0 // pred_region
    _
  $region33: #{inference_net_rnn_cell.1} parent=0 // pred_fallthru
    _
  %v29 = vld [vmem:[%s1] sm:$0xf]
  %v30 = vld [vmem:[%s3] sm:$0xff]
  %v31 = vld [vmem:[%s3 + $0x8] sm:$0xf]
  %v32 = vld [vmem:[%s3 + $0xc] sm:$0xff]
  %v33 = vld [vmem:[%s3 + $0x14] sm:$0xf]
  %v34 = vld [vmem:[%s3 + $0x18] sm:$0xff]
  %v35 = vld [vmem:[%s3 + $0x20] sm:$0xf]
  %v36 = vld [vmem:[%s3 + $0x24] sm:$0xff]
  %v37 = vld [vmem:[%s3 + $0x2c] sm:$0xf]
  %v38 = vld [vmem:[%s3 + $0x30] sm:$0xff]
  %v39 = vld [vmem:[%s3 + $0x38] sm:$0xf]
  %v40 = vld [vmem:[%s3 + $0x3c] sm:$0xff]
  %v41 = vld [vmem:[%s3 + $0x44] sm:$0xf]
  %v42 = vld [vmem:[%s3 + $0x48] sm:$0xff]
  %v43 = vld [vmem:[%s3 + $0x50] sm:$0xf]
  %v44 = vld [vmem:[%s3 + $0x54] sm:$0xff]
  %v45 = vld [vmem:[%s3 + $0x5c] sm:$0xf]
  %v46 = vld [vmem:[%s3 + $0x60] sm:$0xff]
  %v47 = vld [vmem:[%s3 + $0x68] sm:$0xf]
  %v48 = vld [vmem:[%s3 + $0x6c] sm:$0xff]
  %v49 = vld [vmem:[%s3 + $0x74] sm:$0xf]
  %v50 = vld [vmem:[%s3 + $0x78] sm:$0xff]
  %v51 = vld [vmem:[%s3 + $0x80] sm:$0xf]
  %v52 = vld [vmem:[%s3 + $0x84] sm:$0xff]
  %v53 = vld [vmem:[%s3 + $0x8c] sm:$0xf]
  %v54 = vld [vmem:[%s3 + $0x90] sm:$0xff]
  %v55 = vld [vmem:[%s3 + $0x98] sm:$0xf]
  %v56 = vld [vmem:[%s3 + $0x9c] sm:$0xff]
  %v57 = vld [vmem:[%s3 + $0xa4] sm:$0xf]
  %v58 = vld [vmem:[%s3 + $0xa8] sm:$0xff]
  %v59 = vld [vmem:[%s3 + $0xb0] sm:$0xf]
  %v60 = vld [vmem:[%s3 + $0xb4] sm:$0xff]
  %v61 = vld [vmem:[%s3 + $0xbc] sm:$0xf]
  %v62 = vld [vmem:[%s4] sm:$0x7]
  %v64 = vperm.slane %v62, 0
  %v65 = vperm.slane %v62, 1
  %v66 = vperm.slane %v62, 2
  %v102 = vunpack.c.l.b16 %v30
  %v103 = vunpack.c.h.b16 %v30
  %v104 = vunpack.c.l.b16 %v31
  %v105 = vunpack.c.l.b16 %v32
  %v106 = vunpack.c.h.b16 %v32
  %v107 = vunpack.c.l.b16 %v33
  %v108 = vunpack.c.l.b16 %v34
  %v109 = vunpack.c.h.b16 %v34
  %v110 = vunpack.c.l.b16 %v35
  %v111 = vunpack.c.l.b16 %v36
  %v112 = vunpack.c.h.b16 %v36
  %v113 = vunpack.c.l.b16 %v37
  %v114 = vunpack.c.l.b16 %v38
  %v115 = vunpack.c.h.b16 %v38
  %v116 = vunpack.c.l.b16 %v39
  %v117 = vunpack.c.l.b16 %v40
  %v118 = vunpack.c.h.b16 %v40
  %v119 = vunpack.c.l.b16 %v41
  %v120 = vunpack.c.l.b16 %v42
  %v121 = vunpack.c.h.b16 %v42
  %v122 = vunpack.c.l.b16 %v43
  %v123 = vunpack.c.l.b16 %v44
  %v124 = vunpack.c.h.b16 %v44
  %v125 = vunpack.c.l.b16 %v45
  %v126 = vunpack.c.l.b16 %v46
  %v127 = vunpack.c.h.b16 %v46
  %v128 = vunpack.c.l.b16 %v47
  %v129 = vunpack.c.l.b16 %v48
  %v130 = vunpack.c.h.b16 %v48
  %v131 = vunpack.c.l.b16 %v49
  %v132 = vunpack.c.l.b16 %v50
  %v133 = vunpack.c.h.b16 %v50
  %v134 = vunpack.c.l.b16 %v51
  %v135 = vunpack.c.l.b16 %v52
  %v136 = vunpack.c.h.b16 %v52
  %v137 = vunpack.c.l.b16 %v53
  %v138 = vunpack.c.l.b16 %v54
  %v139 = vunpack.c.h.b16 %v54
  %v140 = vunpack.c.l.b16 %v55
  %v141 = vunpack.c.l.b16 %v56
  %v142 = vunpack.c.h.b16 %v56
  %v143 = vunpack.c.l.b16 %v57
  %v144 = vunpack.c.l.b16 %v58
  %v145 = vunpack.c.h.b16 %v58
  %v146 = vunpack.c.l.b16 %v59
  %v147 = vunpack.c.l.b16 %v60
  %v148 = vunpack.c.h.b16 %v60
  %v149 = vunpack.c.l.b16 %v61
  %v150 = vpack.c.b16 %v105, %v102
  %v151 = vpack.c.b16 %v106, %v103
  %v152 = vpack.c.b16 %v107, %v104
  %v153 = vpack.c.b16 %v111, %v108
  %v154 = vpack.c.b16 %v112, %v109
  %v155 = vpack.c.b16 %v113, %v110
  %v156 = vpack.c.b16 %v117, %v114
  %v157 = vpack.c.b16 %v118, %v115
  %v158 = vpack.c.b16 %v119, %v116
  %v159 = vpack.c.b16 %v123, %v120
  %v160 = vpack.c.b16 %v124, %v121
  %v161 = vpack.c.b16 %v125, %v122
  %v162 = vpack.c.b16 %v129, %v126
  %v163 = vpack.c.b16 %v130, %v127
  %v164 = vpack.c.b16 %v131, %v128
  %v165 = vpack.c.b16 %v135, %v132
  %v166 = vpack.c.b16 %v136, %v133
  %v167 = vpack.c.b16 %v137, %v134
  %v168 = vpack.c.b16 %v141, %v138
  %v169 = vpack.c.b16 %v142, %v139
  %v170 = vpack.c.b16 %v143, %v140
  %v171 = vpack.c.b16 %v147, %v144
  %v172 = vpack.c.b16 %v148, %v145
  %v173 = vpack.c.b16 %v149, %v146
  %198 = vmatpush.bf16.msra.mxu0 %v171
  %199 = vmatpush.bf16.msra.mxu0 %v168
  %200 = vmatpush.bf16.msra.mxu0 %v165
  %201 = vmatpush.bf16.msra.mxu0 %v162
  %202 = vmatpush.bf16.msra.mxu0 %v159
  %203 = vmatpush.bf16.msra.mxu0 %v156
  %204 = vmatpush.bf16.msra.mxu0 %v153
  %205 = vmatpush.bf16.msra.mxu0 %v150
  %206 = vmatmul.bf16.gmra.mxu0 %v29
  %v207 = vpop.f32.mrf.mxu0
  %v208 = vadd.f32 %v64, %v207
  %v209 = vpop.f32.mrf.mxu0
  %210 = vdwg.mxu0
  %211 = vmatpush.bf16.msra.mxu0 %v172
  %212 = vmatpush.bf16.msra.mxu0 %v169
  %213 = vmatpush.bf16.msra.mxu0 %v166
  %214 = vmatpush.bf16.msra.mxu0 %v163
  %215 = vmatpush.bf16.msra.mxu0 %v160
  %216 = vmatpush.bf16.msra.mxu0 %v157
  %217 = vmatpush.bf16.msra.mxu0 %v154
  %218 = vmatpush.bf16.msra.mxu0 %v151
  %219 = vmatmul.bf16.gmra.mxu0 %v29
  %v220 = vpop.f32.mrf.mxu0
  %v221 = vadd.f32 %v65, %v220
  %v222 = vpop.f32.mrf.mxu0
  %223 = vdwg.mxu0
  %224 = vmatpush.bf16.msra.mxu0 %v173
  %225 = vmatpush.bf16.msra.mxu0 %v170
  %226 = vmatpush.bf16.msra.mxu0 %v167
  %227 = vmatpush.bf16.msra.mxu0 %v164
  %228 = vmatpush.bf16.msra.mxu0 %v161
  %229 = vmatpush.bf16.msra.mxu0 %v158
  %230 = vmatpush.bf16.msra.mxu0 %v155
  %231 = vmatpush.bf16.msra.mxu0 %v152
  %232 = vmatmul.bf16.gmra.mxu0 %v29
  %v233 = vpop.f32.mrf.mxu0
  %v234 = vadd.f32 %v66, %v233
  %v235 = vpop.f32.mrf.mxu0
  %236 = vdwg.mxu0
  %v237 = vld [vmem:[%s0] sm:$0xf]
  %v238 = vld [vmem:[%s5] sm:$0xf]
  %v239 = vld [vmem:[%s5 + $0x4] sm:$0xf]
  %v240 = vld [vmem:[%s5 + $0x8] sm:$0xf]
  %v241 = vld [vmem:[%s5 + $0xc] sm:$0xf]
  %v242 = vld [vmem:[%s5 + $0x10] sm:$0xf]
  %v243 = vld [vmem:[%s5 + $0x14] sm:$0xf]
  %v244 = vld [vmem:[%s5 + $0x18] sm:$0xf]
  %v245 = vld [vmem:[%s5 + $0x1c] sm:$0xf]
  %v246 = vld [vmem:[%s5 + $0x20] sm:$0xf]
  %v247 = vld [vmem:[%s5 + $0x24] sm:$0xf]
  %v248 = vld [vmem:[%s5 + $0x28] sm:$0xf]
  %v249 = vld [vmem:[%s5 + $0x2c] sm:$0xf]
  %v250 = vld [vmem:[%s5 + $0x30] sm:$0xf]
  %v251 = vld [vmem:[%s5 + $0x34] sm:$0xf]
  %v252 = vld [vmem:[%s5 + $0x38] sm:$0xf]
  %v253 = vld [vmem:[%s5 + $0x3c] sm:$0xf]
  %v254 = vld [vmem:[%s7] sm:$0x1]
  %v256 = vperm.slane %v254, 0
  %v274 = vunpack.c.l.b16 %v238
  %v275 = vunpack.c.l.b16 %v239
  %v276 = vunpack.c.l.b16 %v240
  %v277 = vunpack.c.l.b16 %v241
  %v278 = vunpack.c.l.b16 %v242
  %v279 = vunpack.c.l.b16 %v243
  %v280 = vunpack.c.l.b16 %v244
  %v281 = vunpack.c.l.b16 %v245
  %v282 = vunpack.c.l.b16 %v246
  %v283 = vunpack.c.l.b16 %v247
  %v284 = vunpack.c.l.b16 %v248
  %v285 = vunpack.c.l.b16 %v249
  %v286 = vunpack.c.l.b16 %v250
  %v287 = vunpack.c.l.b16 %v251
  %v288 = vunpack.c.l.b16 %v252
  %v289 = vunpack.c.l.b16 %v253
  %v290 = vpack.c.b16 %v275, %v274
  %v291 = vpack.c.b16 %v277, %v276
  %v292 = vpack.c.b16 %v279, %v278
  %v293 = vpack.c.b16 %v281, %v280
  %v294 = vpack.c.b16 %v283, %v282
  %v295 = vpack.c.b16 %v285, %v284
  %v296 = vpack.c.b16 %v287, %v286
  %v297 = vpack.c.b16 %v289, %v288
  %306 = vmatpush.bf16.msra.mxu0 %v297
  %307 = vmatpush.bf16.msra.mxu0 %v296
  %308 = vmatpush.bf16.msra.mxu0 %v295
  %309 = vmatpush.bf16.msra.mxu0 %v294
  %310 = vmatpush.bf16.msra.mxu0 %v293
  %311 = vmatpush.bf16.msra.mxu0 %v292
  %312 = vmatpush.bf16.msra.mxu0 %v291
  %313 = vmatpush.bf16.msra.mxu0 %v290
  %314 = vmatmul.bf16.gmra.mxu0 %v237
  %v315 = vpop.f32.mrf.mxu0
  %v316 = vadd.f32 %v256, %v315
  %v317 = vpop.f32.mrf.mxu0
  %318 = vdwg.mxu0
  %v319 = vld [vmem:[%s2] sm:$0xf]
  %v320 = vld [vmem:[%s6] sm:$0xf]
  %v321 = vld [vmem:[%s6 + $0x4] sm:$0xf]
  %v322 = vld [vmem:[%s6 + $0x8] sm:$0xf]
  %v323 = vld [vmem:[%s6 + $0xc] sm:$0xf]
  %v324 = vld [vmem:[%s6 + $0x10] sm:$0xf]
  %v325 = vld [vmem:[%s6 + $0x14] sm:$0xf]
  %v326 = vld [vmem:[%s6 + $0x18] sm:$0xf]
  %v327 = vld [vmem:[%s6 + $0x1c] sm:$0xf]
  %v328 = vld [vmem:[%s6 + $0x20] sm:$0xf]
  %v329 = vld [vmem:[%s6 + $0x24] sm:$0xf]
  %v330 = vld [vmem:[%s6 + $0x28] sm:$0xf]
  %v331 = vld [vmem:[%s6 + $0x2c] sm:$0xf]
  %v332 = vld [vmem:[%s6 + $0x30] sm:$0xf]
  %v333 = vld [vmem:[%s6 + $0x34] sm:$0xf]
  %v334 = vld [vmem:[%s6 + $0x38] sm:$0xf]
  %v335 = vld [vmem:[%s6 + $0x3c] sm:$0xf]
  %v336 = vld [vmem:[%s7 + $0x1] sm:$0x1]
  %v338 = vperm.slane %v336, 0
  %v356 = vunpack.c.l.b16 %v320
  %v357 = vunpack.c.l.b16 %v321
  %v358 = vunpack.c.l.b16 %v322
  %v359 = vunpack.c.l.b16 %v323
  %v360 = vunpack.c.l.b16 %v324
  %v361 = vunpack.c.l.b16 %v325
  %v362 = vunpack.c.l.b16 %v326
  %v363 = vunpack.c.l.b16 %v327
  %v364 = vunpack.c.l.b16 %v328
  %v365 = vunpack.c.l.b16 %v329
  %v366 = vunpack.c.l.b16 %v330
  %v367 = vunpack.c.l.b16 %v331
  %v368 = vunpack.c.l.b16 %v332
  %v369 = vunpack.c.l.b16 %v333
  %v370 = vunpack.c.l.b16 %v334
  %v371 = vunpack.c.l.b16 %v335
  %v372 = vpack.c.b16 %v357, %v356
  %v373 = vpack.c.b16 %v359, %v358
  %v374 = vpack.c.b16 %v361, %v360
  %v375 = vpack.c.b16 %v363, %v362
  %v376 = vpack.c.b16 %v365, %v364
  %v377 = vpack.c.b16 %v367, %v366
  %v378 = vpack.c.b16 %v369, %v368
  %v379 = vpack.c.b16 %v371, %v370
  %388 = vmatpush.bf16.msra.mxu0 %v379
  %389 = vmatpush.bf16.msra.mxu0 %v378
  %390 = vmatpush.bf16.msra.mxu0 %v377
  %391 = vmatpush.bf16.msra.mxu0 %v376
  %392 = vmatpush.bf16.msra.mxu0 %v375
  %393 = vmatpush.bf16.msra.mxu0 %v374
  %394 = vmatpush.bf16.msra.mxu0 %v373
  %395 = vmatpush.bf16.msra.mxu0 %v372
  %396 = vmatmul.bf16.gmra.mxu0 %v319
  %v397 = vpop.f32.mrf.mxu0
  %v398 = vadd.f32 %v338, %v397
  %v399 = vpop.f32.mrf.mxu0
  %400 = vdwg.mxu0
  %v401 = vmul.f32 %v208, %v316
  %v402 = vmul.f32 %v221, %v398
  %v403 = vadd.f32 %v401, %v402
  %v404 = vadd.f32 %v403, %v234
  %v405 = vtanh.pop %v404
  %406 = vst [vmem:[%s8] sm:$0xff] %v405
  // Predicated region
  $region34: #{inference_net_rnn_cell.1} parent=0 // pred_check
    _
  $region35: #{inference_net_rnn_cell.1} parent=0 // pred_check_branch
    %408 = sbr.rel (0) target = $region37
  $region36: #{inference_net_rnn_cell.1} parent=0 // pred_region
    _
  $region37: #{inference_net_rnn_cell.1} parent=0 // pred_fallthru
    _
  // Predicated region
  $region38: #{inference_net_rnn_cell.1} parent=0 // pred_check
    _
  $region39: #{inference_net_rnn_cell.1} parent=0 // pred_check_branch
    %410 = sbr.rel (0) target = $region41
  $region40: #{inference_net_rnn_cell.1} parent=0 // pred_region
    _
  $region41: #{inference_net_rnn_cell.1} parent=0 // pred_fallthru
    _

</llo_original>
